<compile_context>
chip_gen: v5e
topology: v5e:2x2
jax: 0.10.0
libtpu: 0.0.40
codegen_flags: <defaults>
</compile_context>

<pallas_src>
import jax
import jax.numpy as jnp
from jax.experimental import pallas as pl
from jax.experimental.pallas import tpu as pltpu

TWO_PI = 2.0 * 3.14159265359     # constant from the PyTorch module
HALF_PI = 0.5 * 3.14159265359    # phase that turns sin into cos


def _rfe_kernel(t_ref, w_ref, p_ref, o_ref):
    # t_ref: (TB, k) f32  -- k packed timesteps per output row (k==1: column)
    # w_ref: (k, L)  f32  -- 2*pi*w duplicated for [sin|cos]; block-diagonal if k>1
    # p_ref: (1, L)  f32  -- phase: 0 on sin lanes, pi/2 on cos lanes
    # o_ref: (TB, L)      -- lane-dense output block
    t = t_ref[...]
    w = w_ref[...]
    if w.shape[0] == 1:
        emb = t * w                                   # (TB,1)*(1,L) VPU outer product
    else:
        # Block-diagonal "matmul" as an exact sum of broadcast products: for each
        # lane exactly one term is nonzero, so this is bit-identical to the k==1
        # path and stays on the VPU (no MXU pass, no precision concerns).
        emb = t[:, 0:1] * w[0:1, :]
        for j in range(1, w.shape[0]):
            emb = emb + t[:, j:j + 1] * w[j:j + 1, :]
    o_ref[...] = jnp.sin(emb + p_ref[...]).astype(o_ref.dtype)   # one sin slab, dense store


def random_fourier_embedding(timesteps, w, *, out_dtype=jnp.float32):
    """timesteps: (B,), w: (1, H) frozen parameter  ->  (B, 2H) = [sin | cos].

    out_dtype may be set to jnp.bfloat16 when the consumer allows (math stays
    in f32, only the store is narrowed), halving output HBM traffic.
    """
    B = timesteps.shape[0]
    w = w.astype(jnp.float32).reshape(1, -1)
    H = w.shape[1]
    two_h = 2 * H

    # --- parameter prep (tiny): fold 2*pi once, bake cos as a phase -----------
    w_cat = jnp.concatenate([w, w], axis=1) * TWO_PI                     # (1, 2H)
    phase = jnp.concatenate(
        [jnp.zeros((1, H), jnp.float32), jnp.full((1, H), HALF_PI, jnp.float32)],
        axis=1)                                                          # (1, 2H)

    # --- small-H lane packing: k batch rows per (near-)128-wide output row ----
    k = 1
    if two_h < 128:
        k_try = min(16, max(1, 128 // two_h))
        if B % k_try == 0:
            k = k_try
    if k > 1:
        w_pack = jnp.kron(jnp.eye(k, dtype=jnp.float32), w_cat)         # (k, k*2H) block-diag
        p_pack = jnp.tile(phase, (1, k))                                 # (1, k*2H)
        t2d = timesteps.astype(jnp.float32).reshape(B // k, k)
    else:
        w_pack, p_pack = w_cat, phase
        t2d = timesteps.astype(jnp.float32).reshape(B, 1)

    rows, lane_w = t2d.shape[0], w_pack.shape[1]
    out_itemsize = jnp.dtype(out_dtype).itemsize

    # --- tile size from a generation-aware VMEM budget -------------------------
    try:
        vmem_cap = int(getattr(pltpu.get_tpu_info(), "vmem_capacity_bytes",
                               64 * 1024 * 1024))
    except Exception:  # pragma: no cover - conservative fallback
        vmem_cap = 64 * 1024 * 1024
    # Per-buffer bytes for (output block + t block); double-buffered by Pallas.
    target = min(8 * 1024 * 1024, vmem_cap // 8)
    row_bytes = lane_w * out_itemsize + 128 * 4      # t tile lane-pads to 128 lanes
    tb = max(16, (target // row_bytes) // 16 * 16)   # multiple of 16 (bf16-safe)
    if tb >= rows:
        tb = rows                                    # single full-extent block

    grid = (pl.cdiv(rows, tb),)                      # ragged last block is masked

    cost = pl.CostEstimate(
        flops=2 * rows * lane_w,
        transcendentals=rows * lane_w,
        bytes_accessed=rows * lane_w * out_itemsize + rows * k * 4
        + (k + 1) * lane_w * 4,
    )

    out = pl.pallas_call(
        _rfe_kernel,
        out_shape=jax.ShapeDtypeStruct((rows, lane_w), out_dtype),
        grid_spec=pltpu.PrefetchScalarGridSpec(
            num_scalar_prefetch=0,
            grid=grid,
            in_specs=[
                pl.BlockSpec((tb, k), lambda i: (i, 0)),       # timestep tile
                pl.BlockSpec((k, lane_w), lambda i: (0, 0)),   # weight (resident)
                pl.BlockSpec((1, lane_w), lambda i: (0, 0)),   # phase (resident)
            ],
            out_specs=pl.BlockSpec((tb, lane_w), lambda i: (i, 0)),
        ),
        compiler_params=pltpu.CompilerParams(
            dimension_semantics=("parallel",),
            vmem_limit_bytes=32 * 1024 * 1024,       # > v5e's 16 MiB scoped default
        ),
        cost_estimate=cost,
    )(t2d, w_pack, p_pack)

    return out.reshape(B, two_h)   # pure metadata reshape (row-major) when packed


if __name__ == "__main__":
    key = jax.random.PRNGKey(0)
    k_w, k_t = jax.random.split(key)

    embedding_dim = 32          # -> H = 16, output (B, 32)
    scale = 16.0
    batch = 8

    # Frozen module parameter: w = randn(1, embedding_dim // 2) * scale.
    w = jax.random.normal(k_w, (1, embedding_dim // 2), dtype=jnp.float32) * scale
    timesteps = jax.random.uniform(k_t, (batch,), dtype=jnp.float32)

    out = random_fourier_embedding(timesteps, w)
    out = jax.block_until_ready(out)

    # Reference mirroring the PyTorch forward (elementwise, exact f32 products).
    emb_ref = timesteps[:, None] * (w * TWO_PI)
    ref = jnp.concatenate([jnp.sin(emb_ref), jnp.cos(emb_ref)], axis=1)
    assert out.shape == (batch, embedding_dim)
    # cos computed as sin(x + pi/2) agrees with direct cos to within a few f32
    # ulps of the argument (|arg| ~ 3e2 with scale=16), hence the 2e-4 tolerance.
    err = float(jnp.max(jnp.abs(out - ref)))
    assert jnp.allclose(out, ref, atol=2e-4, rtol=2e-4), err

    print("KERNEL_OK")
</pallas_src>

<mosaic_0001>
module attributes {stable_mosaic.version = 11 : i64} {
  func.func @_rfe_kernel(%arg0: i32, %arg1: memref<2x4xf32, #tpu.memory_space<vmem>>, %arg2: memref<4x128xf32, #tpu.memory_space<vmem>>, %arg3: memref<1x128xf32, #tpu.memory_space<vmem>>, %arg4: memref<2x128xf32, #tpu.memory_space<vmem>>) attributes {dimension_semantics = [#tpu.dimension_semantics<parallel>], iteration_bounds = array<i64: 1>, scalar_prefetch = 0 : i64, scratch_operands = 0 : i64, tpu.core_type = #tpu.core_type<tc>, window_params = [{transform_indices = @transform_0, window_bounds = array<i64: 2, 4>}, {pipeline_mode = #tpu.pipeline_mode<synchronous>, transform_indices = @transform_1, window_bounds = array<i64: 4, 128>}, {pipeline_mode = #tpu.pipeline_mode<synchronous>, transform_indices = @transform_2, window_bounds = array<i64: 1, 128>}, {transform_indices = @transform_3, window_bounds = array<i64: 2, 128>}]} {
    %c0 = arith.constant 0 : index
    %c0_0 = arith.constant 0 : index
    %0 = vector.load %arg1[%c0, %c0_0] : memref<2x4xf32, #tpu.memory_space<vmem>>, vector<2x4xf32>
    %c0_1 = arith.constant 0 : index
    %c0_2 = arith.constant 0 : index
    %1 = vector.load %arg2[%c0_1, %c0_2] : memref<4x128xf32, #tpu.memory_space<vmem>>, vector<4x128xf32>
    %2 = vector.extract_strided_slice %0 {offsets = [0, 0], sizes = [2, 1], strides = [1, 1]} : vector<2x4xf32> to vector<2x1xf32>
    %3 = vector.extract_strided_slice %1 {offsets = [0, 0], sizes = [1, 128], strides = [1, 1]} : vector<4x128xf32> to vector<1x128xf32>
    %4 = vector.broadcast %2 : vector<2x1xf32> to vector<2x128xf32>
    %5 = vector.broadcast %3 : vector<1x128xf32> to vector<2x128xf32>
    %6 = arith.mulf %4, %5 : vector<2x128xf32>
    %7 = vector.extract_strided_slice %0 {offsets = [0, 1], sizes = [2, 1], strides = [1, 1]} : vector<2x4xf32> to vector<2x1xf32>
    %8 = vector.extract_strided_slice %1 {offsets = [1, 0], sizes = [1, 128], strides = [1, 1]} : vector<4x128xf32> to vector<1x128xf32>
    %9 = vector.broadcast %7 : vector<2x1xf32> to vector<2x128xf32>
    %10 = vector.broadcast %8 : vector<1x128xf32> to vector<2x128xf32>
    %11 = arith.mulf %9, %10 : vector<2x128xf32>
    %12 = arith.addf %6, %11 : vector<2x128xf32>
    %13 = vector.extract_strided_slice %0 {offsets = [0, 2], sizes = [2, 1], strides = [1, 1]} : vector<2x4xf32> to vector<2x1xf32>
    %14 = vector.extract_strided_slice %1 {offsets = [2, 0], sizes = [1, 128], strides = [1, 1]} : vector<4x128xf32> to vector<1x128xf32>
    %15 = vector.broadcast %13 : vector<2x1xf32> to vector<2x128xf32>
    %16 = vector.broadcast %14 : vector<1x128xf32> to vector<2x128xf32>
    %17 = arith.mulf %15, %16 : vector<2x128xf32>
    %18 = arith.addf %12, %17 : vector<2x128xf32>
    %19 = vector.extract_strided_slice %0 {offsets = [0, 3], sizes = [2, 1], strides = [1, 1]} : vector<2x4xf32> to vector<2x1xf32>
    %20 = vector.extract_strided_slice %1 {offsets = [3, 0], sizes = [1, 128], strides = [1, 1]} : vector<4x128xf32> to vector<1x128xf32>
    %21 = vector.broadcast %19 : vector<2x1xf32> to vector<2x128xf32>
    %22 = vector.broadcast %20 : vector<1x128xf32> to vector<2x128xf32>
    %23 = arith.mulf %21, %22 : vector<2x128xf32>
    %24 = arith.addf %18, %23 : vector<2x128xf32>
    %c0_3 = arith.constant 0 : index
    %c0_4 = arith.constant 0 : index
    %25 = vector.load %arg3[%c0_3, %c0_4] : memref<1x128xf32, #tpu.memory_space<vmem>>, vector<1x128xf32>
    %26 = vector.broadcast %25 : vector<1x128xf32> to vector<2x128xf32>
    %27 = arith.addf %24, %26 : vector<2x128xf32>
    %28 = math.sin %27 : vector<2x128xf32>
    %c0_5 = arith.constant 0 : index
    %c0_6 = arith.constant 0 : index
    %29 = vector.load %arg4[%c0_5, %c0_6] : memref<2x128xf32, #tpu.memory_space<vmem>>, vector<2x128xf32>
    tpu.vector_store %arg4[%c0_5, %c0_6], %28 {strides = array<i32>} : memref<2x128xf32, #tpu.memory_space<vmem>>, vector<2x128xf32>,
    return
  }
  func.func @transform_0(%arg0: i32) -> (i32, i32) {
    %c0_i32 = arith.constant 0 : i32
    %c0_i32_0 = arith.constant 0 : i32
    return %arg0, %c0_i32 : i32, i32
  }
  func.func @transform_1(%arg0: i32) -> (i32, i32) {
    %c0_i32 = arith.constant 0 : i32
    %c0_i32_0 = arith.constant 0 : i32
    %c0_i32_1 = arith.constant 0 : i32
    return %c0_i32, %c0_i32_0 : i32, i32
  }
  func.func @transform_2(%arg0: i32) -> (i32, i32) {
    %c0_i32 = arith.constant 0 : i32
    %c0_i32_0 = arith.constant 0 : i32
    %c0_i32_1 = arith.constant 0 : i32
    return %c0_i32, %c0_i32_0 : i32, i32
  }
  func.func @transform_3(%arg0: i32) -> (i32, i32) {
    %c0_i32 = arith.constant 0 : i32
    %c0_i32_0 = arith.constant 0 : i32
    return %arg0, %c0_i32 : i32, i32
  }
}

</mosaic_0001>

<llo_original>
// kernel: tpu_custom_call.1
$region0: #{tpu_custom_call.1}
  #allocation0 [shape = 'u32[]', space=smem, size = 0x4, offset = 0x4, fixed_abs, tag = 'smem constant byte address 0x4 - core index']
  #allocation1 [shape = 'u32[72,128]{1,0:T(1,128)}', space=vmem, size = 0x9000, scoped, tag = 'internal scratch']
  %s0 = inlined_call_operand.hbm [shape: f32[2,4], index: 0, kind: input, shape index: {}]
  %s1 = inlined_call_operand.hbm [shape: f32[4,128], index: 1, kind: input, shape index: {}]
  %s2 = inlined_call_operand.vmem [shape: f32[1,128], index: 2, kind: input, shape index: {}]
  %s3 = inlined_call_operand.hbm [shape: f32[2,128], index: 3, kind: output, shape index: {}]
  %s4 = sld [smem:[#allocation0]]
  $region30: #{tpu_custom_call.1} parent=0
    _
  %s6 = ssub.s32 1, %s4
  %s7 = scalar_select 0, %s6, %s4
  $region1: #{tpu_custom_call.1} parent=0
    #allocation2 [shape = 'u8[1024]{0}', space=vmem, size = 0x400, scoped, tag = 'input window, operand 0, single buffered']
    #allocation3 [shape = 's32[1]{0}', space=sflag, size = 0x4, scoped, tag = 'scoped memory for tpu_custom_call.1']
    #allocation4 [shape = 's32[1]{0}', space=sflag, size = 0x4, scoped, tag = 'scoped memory for tpu_custom_call.1']
    #allocation5 [shape = 'u8[2048]{0}', space=vmem, size = 0x800, scoped, tag = 'input window, operand 1, single buffered']
    #allocation6 [shape = 's32[1]{0}', space=sflag, size = 0x4, scoped, tag = 'scoped memory for tpu_custom_call.1']
    #allocation7 [shape = 'u8[1024]{0}', space=vmem, size = 0x400, scoped, tag = 'output window, operand 0, single buffered']
    %8 = vsyncpa [#allocation3], 0
    %9 = vsyncpa [#allocation6], 0
    %10 = vsyncpa [#allocation4], 0
    // Predicated region
    $region2: #{tpu_custom_call.1} parent=1 // pred_check
      _
    $region3: #{tpu_custom_call.1} parent=1 // pred_check_branch
      %12 = sbr.rel (0) target = $region5
    $region4: #{tpu_custom_call.1} parent=1 // pred_region
      %14 = vsyncadd [#allocation3], 0
      %s16 = sshll.u32 %s0, 4
      %s17 = int_to_ptr.hbm [resolvable:$true] %s16
      %s18 = sshll.u32 [#allocation2], 4
      %s19 = int_to_ptr.vmem [resolvable:$true] %s18
      %21 = dma.hbm_to_vmem [thread:$0]  %s17, 32, %s19, [#allocation3]
    $region5: #{tpu_custom_call.1} parent=1 // pred_fallthru
      _
    // Predicated region
    $region6: #{tpu_custom_call.1} parent=1 // pred_check
      _
    $region7: #{tpu_custom_call.1} parent=1 // pred_check_branch
      %23 = sbr.rel (0) target = $region9
    $region8: #{tpu_custom_call.1} parent=1 // pred_region
      %25 = vsyncadd [#allocation6], 0
      %s27 = sshll.u32 %s1, 4
      %s28 = int_to_ptr.hbm [resolvable:$true] %s27
      %s29 = sshll.u32 [#allocation5], 4
      %s30 = int_to_ptr.vmem [resolvable:$true] %s29
      %32 = dma.hbm_to_vmem [thread:$0]  %s28, 64, %s30, [#allocation6]
    $region9: #{tpu_custom_call.1} parent=1 // pred_fallthru
      _
    // Predicated region
    $region10: #{tpu_custom_call.1} parent=1 // pred_check
      _
    $region11: #{tpu_custom_call.1} parent=1 // pred_check_branch
      %34 = sbr.rel (0) target = $region13
    $region12: #{tpu_custom_call.1} parent=1 // pred_region
      _
    $region13: #{tpu_custom_call.1} parent=1 // pred_fallthru
      _
    // Predicated region
    $region14: #{tpu_custom_call.1} parent=1 // pred_check
      _
    $region15: #{tpu_custom_call.1} parent=1 // pred_check_branch
      %36 = sbr.rel (0) target = $region17
    $region16: #{tpu_custom_call.1} parent=1 // pred_region
      %38 = dma.done [#allocation3], 32
    $region17: #{tpu_custom_call.1} parent=1 // pred_fallthru
      _
    // Predicated region
    $region18: #{tpu_custom_call.1} parent=1 // pred_check
      _
    $region19: #{tpu_custom_call.1} parent=1 // pred_check_branch
      %40 = sbr.rel (0) target = $region21
    $region20: #{tpu_custom_call.1} parent=1 // pred_region
      %42 = dma.done [#allocation6], 64
    $region21: #{tpu_custom_call.1} parent=1 // pred_fallthru
      _
    %v43 = vld [vmem:[#allocation2] sm:$0x3]
    %v44 = vld [vmem:[#allocation5] sm:$0xf]
    %46 = vset.pattern.permute.xlu0 0
    %47 = vperm.xlu0 %46, %v43
    %v48 = vpop.permute.xlu0 %47
    %v50 = vperm.slane %v44, 0
    %v51 = vmul.f32 %v48, %v50
    %52 = vset.pattern.permute.xlu0 1
    %53 = vperm.xlu0 %52, %v43
    %v54 = vpop.permute.xlu0 %53
    %v56 = vperm.slane %v44, 1
    %v57 = vmul.f32 %v54, %v56
    %v58 = vadd.f32 %v51, %v57
    %59 = vset.pattern.permute.xlu0 2
    %60 = vperm.xlu0 %59, %v43
    %v61 = vpop.permute.xlu0 %60
    %v63 = vperm.slane %v44, 2
    %v64 = vmul.f32 %v61, %v63
    %v65 = vadd.f32 %v58, %v64
    %66 = vset.pattern.permute.xlu0 3
    %67 = vperm.xlu0 %66, %v43
    %v68 = vpop.permute.xlu0 %67
    %v70 = vperm.slane %v44, 3
    %v71 = vmul.f32 %v68, %v70
    %v72 = vadd.f32 %v65, %v71
    %v73 = vld [vmem:[%s2] sm:$0x1]
    %v75 = vperm.slane %v73, 0
    %v77 = vadd.f32 %v72, %v75
    %v78 = vand.u32 2147483647, %v77
    %vm79 = vcmp.le.f32.partialorder %v78, 0.7853982
    %vm80 = vcmp.lt.s32.totalorder %v77, 0
    %v81 = vand.u32 %v77, 2139095040
    %v82 = vshrl.u32 %v81, 23
    %v83 = vsub.s32 %v82, 127
    %v84 = vand.u32 2147483647, %v77
    %v85 = vand.u32 %v84, 8388607
    %v86 = vor.u32 %v85, 8388608
    %v87 = vsub.s32 0, %v86
    %v88 = vadd.s32 %v83, 1
    %vm89 = vcmp.gt.s32.totalorder %v88, 0
    %v90 = vsel %vm89, %v88, 0
    %v91 = vshrl.u32 %v90, 5
    %v92 = vand.u32 %v90, 31
    %v93 = vsub.s32 32, %v92
    %v94 = vshrl.u32 683565275, %v93
    %v95 = vshll.u32 683565275, %v92
    %v96 = vshrl.u32 2475754826, %v93
    %v97 = vor.u32 %v95, %v96
    %v98 = vshll.u32 2475754826, %v92
    %v99 = vshrl.u32 2131351028, %v93
    %v100 = vor.u32 %v98, %v99
    %v101 = vshll.u32 2131351028, %v92
    %v102 = vshrl.u32 2102212464, %v93
    %v103 = vor.u32 %v101, %v102
    %v104 = vshll.u32 2102212464, %v92
    %v105 = vshrl.u32 920167782, %v93
    %v106 = vor.u32 %v104, %v105
    %v107 = vshll.u32 920167782, %v92
    %v108 = vshrl.u32 1326507024, %v93
    %v109 = vor.u32 %v107, %v108
    %vm110 = vcmp.lt.s32.totalorder %v91, 1
    %vm111 = vcmp.lt.s32.totalorder %v91, 2
    %vm112 = vcmp.lt.s32.totalorder %v91, 3
    %vm113 = vcmp.lt.s32.totalorder %v91, 4
    %v114 = vsel %vm110, %v94, %v97
    %v115 = vsel %vm113, %v103, 2102212464
    %v116 = vsel %vm112, %v100, %v115
    %v117 = vsel %vm111, %v114, %v116
    %v118 = vsel %vm110, %v97, %v100
    %v119 = vsel %vm113, %v106, 920167782
    %v120 = vsel %vm112, %v103, %v119
    %v121 = vsel %vm111, %v118, %v120
    %v122 = vsel %vm110, %v100, %v103
    %v123 = vsel %vm113, %v109, 1326507024
    %v124 = vsel %vm112, %v106, %v123
    %v125 = vsel %vm111, %v122, %v124
    %v126 = vshll.u32 %v86, 8
    %v127 = vand.u32 %v126, 65535
    %v128 = vshrl.u32 %v126, 16
    %v129 = vand.u32 %v125, 65535
    %v130 = vshrl.u32 %v125, 16
    %v131 = vmul.u32 %v127, %v129
    %v132 = vmul.u32 %v127, %v130
    %v133 = vmul.u32 %v128, %v129
    %v134 = vmul.u32 %v128, %v130
    %v135 = vshll.u32 %v132, 16
    %v136 = vshrl.u32 %v132, 16
    %v137 = vshll.u32 %v133, 16
    %v138 = vshrl.u32 %v133, 16
    %vm139 = vc.u32 %v131, %v135
    %v140 = vsel %vm139, 1, 0
    %v141 = vadd.s32 %v131, %v135
    %v142 = vadd.s32 %v134, %v140
    %vm143 = vc.u32 %v141, %v137
    %v144 = vsel %vm143, 1, 0
    %v145 = vadd.s32 %v141, %v137
    %v146 = vadd.s32 %v142, %v144
    %v147 = vadd.s32 %v146, %v136
    %v148 = vadd.s32 %v147, %v138
    %v149 = vand.u32 %v126, 65535
    %v150 = vshrl.u32 %v126, 16
    %v151 = vand.u32 %v121, 65535
    %v152 = vshrl.u32 %v121, 16
    %v153 = vmul.u32 %v149, %v151
    %v154 = vmul.u32 %v149, %v152
    %v155 = vmul.u32 %v150, %v151
    %v156 = vmul.u32 %v150, %v152
    %v157 = vshll.u32 %v154, 16
    %v158 = vshrl.u32 %v154, 16
    %v159 = vshll.u32 %v155, 16
    %v160 = vshrl.u32 %v155, 16
    %vm161 = vc.u32 %v153, %v157
    %v162 = vsel %vm161, 1, 0
    %v163 = vadd.s32 %v153, %v157
    %v164 = vadd.s32 %v156, %v162
    %vm165 = vc.u32 %v163, %v159
    %v166 = vsel %vm165, 1, 0
    %v167 = vadd.s32 %v163, %v159
    %v168 = vadd.s32 %v164, %v166
    %v169 = vadd.s32 %v168, %v158
    %v170 = vadd.s32 %v169, %v160
    %v171 = vmul.u32 %v126, %v117
    %v172 = vadd.s32 %v148, %v167
    %vm173 = vc.u32 %v148, %v167
    %v174 = vadd.s32 %v170, 1
    %v175 = vsel %vm173, %v174, %v170
    %v176 = vadd.s32 %v171, %v175
    %v177 = vadd.s32 %v176, 536870912
    %v178 = vshrl.u32 %v177, 30
    %v179 = vshll.u32 %v178, 30
    %v180 = vsub.s32 %v176, %v179
    %vm181 = vcmp.lt.s32.totalorder %v180, 0
    %v182 = vsub.s32 0, %v180
    %v183 = vsel %vm181, %v182, %v180
    %v184 = vclz %v183
    %v185 = vsub.s32 %v184, 2
    %vm186 = vcmp.gt.s32.totalorder 0, %v185
    %v187 = vsel %vm186, 0, %v185
    %v188 = vsub.s32 32, %v187
    %v189 = vshll.u32 %v180, %v187
    %v190 = vshrl.u32 %v172, %v188
    %v191 = vor.u32 %v189, %v190
    %v192 = vsub.s32 4294967266, %v187
    %v193 = vadd.s32 %v192, 127
    %v194 = vshll.u32 %v193, 23
    %v195 = vor.u32 4788187, %v194
    %v196 = vand.u32 2147483647, %v195
    %v198 = vcvt.s32.f32 %v191
    %v199 = vmul.f32 %v198, %v196
    %v200 = vxor.u32 %v199, 2147483648
    %v201 = vsel %vm80, %v200, %v199
    %v202 = vsub.s32 4, %v178
    %v203 = vsel %vm80, %v202, %v178
    %v204 = vsel %vm79, %v77, %v201
    %v205 = vsel %vm79, 0, %v203
    %v206 = vmul.f32 %v204, %v204
    %v207 = vmul.f32 %v206, -0.001358992
    %v208 = vadd.f32 %v207, 0.041655596
    %v209 = vmul.f32 %v206, %v208
    %v210 = vadd.f32 %v209, -0.4999988
    %v211 = vmul.f32 %v206, %v210
    %v212 = vadd.f32 1.0, %v211
    %v213 = vmul.f32 %v204, %v204
    %v214 = vmul.f32 %v213, -0.00019511016
    %v215 = vadd.f32 %v214, 0.008332121
    %v216 = vmul.f32 %v213, %v215
    %v217 = vadd.f32 %v216, -0.16666654
    %v218 = vmul.f32 %v213, %v217
    %v219 = vadd.f32 %v218, 1.0
    %v220 = vmul.f32 %v219, %v204
    %vm221 = vweird.f32 %v77
    %v222 = vadd.s32 %v205, 3
    %v223 = vand.u32 %v222, 3
    %vm224 = vcmp.lt.s32.totalorder %v223, 2
    %vm225 = vcmp.eq.s32.totalorder %v223, 0
    %v226 = vxor.u32 %v220, 2147483648
    %v227 = vsel %vm225, %v212, %v226
    %vm228 = vcmp.eq.s32.totalorder %v223, 2
    %v229 = vxor.u32 %v212, 2147483648
    %v230 = vsel %vm228, %v229, %v220
    %v231 = vsel %vm224, %v227, %v230
    %v232 = vsel %vm221, nan, %v231
    %233 = vst [vmem:[#allocation7] sm:$0x3] %v232
    // Predicated region
    $region22: #{tpu_custom_call.1} parent=1 // pred_check
      _
    $region23: #{tpu_custom_call.1} parent=1 // pred_check_branch
      %235 = sbr.rel (0) target = $region25
    $region24: #{tpu_custom_call.1} parent=1 // pred_region
      %237 = vsyncadd [#allocation4], 0
      %s239 = sshll.u32 [#allocation7], 4
      %s240 = int_to_ptr.vmem [resolvable:$true] %s239
      %s241 = sshll.u32 %s3, 4
      %s242 = int_to_ptr.hbm [resolvable:$true] %s241
      %244 = dma.vmem_to_hbm [thread:$0]  %s240, 32, %s242, [#allocation4]
    $region25: #{tpu_custom_call.1} parent=1 // pred_fallthru
      _
    // Predicated region
    $region26: #{tpu_custom_call.1} parent=1 // pred_check
      _
    $region27: #{tpu_custom_call.1} parent=1 // pred_check_branch
      %246 = sbr.rel (0) target = $region29
    $region28: #{tpu_custom_call.1} parent=1 // pred_region
      %248 = dma.done [#allocation4], 32
    $region29: #{tpu_custom_call.1} parent=1 // pred_fallthru
      _
    %249 = vsyncpa [#allocation3], 1
    %250 = vsyncpa [#allocation6], 1
    %251 = vsyncpa [#allocation4], 1

</llo_original>
